<compile_context>
chip_gen: v7x
topology: tpu7x:2x2x1
jax: 0.10.0
libtpu: 0.0.40
codegen_flags: <defaults>
</compile_context>

<pallas_src>
import jax
import jax.numpy as jnp
from jax.experimental import pallas as pl
from jax.experimental.pallas import tpu as pltpu


def _round_up(n, m):
    return ((n + m - 1) // m) * m


def _detect_cost_kernel(x_ref, y_ref,
                        w1x_ref, w1y_ref, b1_ref,
                        w2_ref, b2_ref,
                        w3_ref, b3_ref,
                        o_ref):
    x = x_ref[...]                      # (TB, dx)
    y = y_ref[...]                      # (TB, dy)

    # fc1 on the (virtual) concatenation, then ReLU
    h = (jnp.dot(x, w1x_ref[...], preferred_element_type=jnp.float32)
         + jnp.dot(y, w1y_ref[...], preferred_element_type=jnp.float32)
         + b1_ref[...])                 # (TB, 6)
    h = jnp.maximum(h, 0.0)

    # fc2 + ReLU
    h = jnp.dot(h, w2_ref[...], preferred_element_type=jnp.float32) + b2_ref[...]
    h = jnp.maximum(h, 0.0)

    # fc3 (no activation)
    out = jnp.dot(h, w3_ref[...], preferred_element_type=jnp.float32) + b3_ref[...]
    o_ref[...] = out.astype(o_ref.dtype)


def detect_cost_forward(x, y, params, *, block_b=1024):
    """x: (B, dx), y: (B, dy) with dx + dy == 10. Returns (B, 1) float32."""
    B, dx = x.shape
    By, dy = y.shape
    assert B == By, "x and y must share the batch dimension"
    assert dx + dy == 10, "fc1 expects 10 input features (cat of x and y)"

    w1, b1, w2, b2, w3, b3 = (params["w1"], params["b1"],
                              params["w2"], params["b2"],
                              params["w3"], params["b3"])

    # Split fc1 weight into x-part / y-part; keep biases 2D for TPU layout.
    w1x = w1[:dx, :]                    # (dx, 6)
    w1y = w1[dx:, :]                    # (dy, 6)
    b1_2d = b1.reshape(1, -1)
    b2_2d = b2.reshape(1, -1)
    b3_2d = b3.reshape(1, -1)

    # Batch tile: multiple of 8 sublanes, capped so double-buffered padded
    # tiles (TB * 128 lanes * 4 B each) stay small on every TPU generation.
    tb = min(block_b, _round_up(B, 8))
    grid = (pl.cdiv(B, tb),)

    # Weights / biases: full-array block, constant index_map -> VMEM-resident.
    resident = lambda a: pl.BlockSpec(a.shape, lambda i: (0,) * a.ndim)

    # Advisory cost: the kernel is firmly HBM-bound (~204 FLOPs per 44 bytes).
    flops = 2 * B * (10 * 6 + 6 * 6 + 6 * 1)
    bytes_accessed = B * (dx + dy + 1) * 4 + (10 * 6 + 6 + 6 * 6 + 6 + 6 + 1) * 4

    return pl.pallas_call(
        _detect_cost_kernel,
        out_shape=jax.ShapeDtypeStruct((B, 1), jnp.float32),
        grid=grid,
        in_specs=[pl.BlockSpec((tb, dx), lambda i: (i, 0)),
                  pl.BlockSpec((tb, dy), lambda i: (i, 0)),
                  resident(w1x), resident(w1y), resident(b1_2d),
                  resident(w2), resident(b2_2d),
                  resident(w3), resident(b3_2d)],
        out_specs=pl.BlockSpec((tb, 1), lambda i: (i, 0)),
        compiler_params=pltpu.CompilerParams(
            dimension_semantics=("parallel",),
            vmem_limit_bytes=32 * 1024 * 1024),
        cost_estimate=pl.CostEstimate(
            flops=flops, transcendentals=0, bytes_accessed=bytes_accessed),
    )(x, y, w1x, w1y, b1_2d, w2, b2_2d, w3, b3_2d)


def init_params(key):
    """Deterministic init matching nn.Linear shapes (stored as (in, out))."""
    ks = jax.random.split(key, 6)

    def lin(kw, kb, fan_in, fan_out):
        bound = 1.0 / jnp.sqrt(fan_in)
        w = jax.random.uniform(kw, (fan_in, fan_out), jnp.float32, -bound, bound)
        b = jax.random.uniform(kb, (fan_out,), jnp.float32, -bound, bound)
        return w, b

    w1, b1 = lin(ks[0], ks[1], 10, 6)
    w2, b2 = lin(ks[2], ks[3], 6, 6)
    w3, b3 = lin(ks[4], ks[5], 6, 1)
    return {"w1": w1, "b1": b1, "w2": w2, "b2": b2, "w3": w3, "b3": b3}


def reference_forward(x, y, p):
    out = jnp.concatenate([x, y], axis=1)
    out = jnp.maximum(out @ p["w1"] + p["b1"], 0.0)
    out = jnp.maximum(out @ p["w2"] + p["b2"], 0.0)
    return out @ p["w3"] + p["b3"]


if __name__ == "__main__":
    key = jax.random.PRNGKey(0)
    kx, ky, kp = jax.random.split(key, 3)

    # Small shapes, but B chosen to exercise multiple batch tiles plus a
    # ragged last tile (block_b=64, B=200 -> grid of 4 with a partial tile).
    B, dx, dy = 200, 6, 4               # cat(x, y) -> 10 features, as fc1 expects
    x = jax.random.normal(kx, (B, dx), jnp.float32)
    y = jax.random.normal(ky, (B, dy), jnp.float32)
    params = init_params(kp)

    out = detect_cost_forward(x, y, params, block_b=64)
    out = jax.block_until_ready(out)

    ref = reference_forward(x, y, params)
    assert out.shape == (B, 1)
    assert jnp.allclose(out, ref, atol=1e-5, rtol=1e-5)

    print("KERNEL_OK")
</pallas_src>

<mosaic_0001>
module attributes {stable_mosaic.version = 11 : i64} {
  func.func @_detect_cost_kernel(%arg0: i32, %arg1: memref<64x6xf32, #tpu.memory_space<vmem>>, %arg2: memref<64x4xf32, #tpu.memory_space<vmem>>, %arg3: memref<6x6xf32, #tpu.memory_space<vmem>>, %arg4: memref<4x6xf32, #tpu.memory_space<vmem>>, %arg5: memref<1x6xf32, #tpu.memory_space<vmem>>, %arg6: memref<6x6xf32, #tpu.memory_space<vmem>>, %arg7: memref<1x6xf32, #tpu.memory_space<vmem>>, %arg8: memref<6x1xf32, #tpu.memory_space<vmem>>, %arg9: memref<1x1xf32, #tpu.memory_space<vmem>>, %arg10: memref<64x1xf32, #tpu.memory_space<vmem>>) attributes {dimension_semantics = [#tpu.dimension_semantics<parallel>], iteration_bounds = array<i64: 4>, scalar_prefetch = 0 : i64, scratch_operands = 0 : i64, tpu.core_type = #tpu.core_type<tc>, window_params = [{transform_indices = @transform_0, window_bounds = array<i64: 64, 6>}, {transform_indices = @transform_1, window_bounds = array<i64: 64, 4>}, {pipeline_mode = #tpu.pipeline_mode<synchronous>, transform_indices = @transform_2, window_bounds = array<i64: 6, 6>}, {pipeline_mode = #tpu.pipeline_mode<synchronous>, transform_indices = @transform_3, window_bounds = array<i64: 4, 6>}, {pipeline_mode = #tpu.pipeline_mode<synchronous>, transform_indices = @transform_4, window_bounds = array<i64: 1, 6>}, {pipeline_mode = #tpu.pipeline_mode<synchronous>, transform_indices = @transform_5, window_bounds = array<i64: 6, 6>}, {pipeline_mode = #tpu.pipeline_mode<synchronous>, transform_indices = @transform_6, window_bounds = array<i64: 1, 6>}, {pipeline_mode = #tpu.pipeline_mode<synchronous>, transform_indices = @transform_7, window_bounds = array<i64: 6, 1>}, {pipeline_mode = #tpu.pipeline_mode<synchronous>, transform_indices = @transform_8, window_bounds = array<i64: 1, 1>}, {transform_indices = @transform_9, window_bounds = array<i64: 64, 1>}]} {
    %c0 = arith.constant 0 : index
    %c0_0 = arith.constant 0 : index
    %0 = vector.load %arg1[%c0, %c0_0] : memref<64x6xf32, #tpu.memory_space<vmem>>, vector<64x6xf32>
    %c0_1 = arith.constant 0 : index
    %c0_2 = arith.constant 0 : index
    %1 = vector.load %arg2[%c0_1, %c0_2] : memref<64x4xf32, #tpu.memory_space<vmem>>, vector<64x4xf32>
    %c0_3 = arith.constant 0 : index
    %c0_4 = arith.constant 0 : index
    %2 = vector.load %arg3[%c0_3, %c0_4] : memref<6x6xf32, #tpu.memory_space<vmem>>, vector<6x6xf32>
    %cst = arith.constant dense<0.000000e+00> : vector<64x6xf32>
    %3 = tpu.matmul %0, %2, %cst {dimension_numbers = #tpu.dot_dimension_numbers<[1], [0], [0], [1], [0, 0, 1, 1], [], []>} : vector<64x6xf32>, vector<6x6xf32>, vector<64x6xf32> -> vector<64x6xf32>
    %c0_5 = arith.constant 0 : index
    %c0_6 = arith.constant 0 : index
    %4 = vector.load %arg4[%c0_5, %c0_6] : memref<4x6xf32, #tpu.memory_space<vmem>>, vector<4x6xf32>
    %cst_7 = arith.constant dense<0.000000e+00> : vector<64x6xf32>
    %5 = tpu.matmul %1, %4, %cst_7 {dimension_numbers = #tpu.dot_dimension_numbers<[1], [0], [0], [1], [0, 0, 1, 1], [], []>} : vector<64x4xf32>, vector<4x6xf32>, vector<64x6xf32> -> vector<64x6xf32>
    %6 = arith.addf %3, %5 : vector<64x6xf32>
    %c0_8 = arith.constant 0 : index
    %c0_9 = arith.constant 0 : index
    %7 = vector.load %arg5[%c0_8, %c0_9] : memref<1x6xf32, #tpu.memory_space<vmem>>, vector<1x6xf32>
    %8 = vector.broadcast %7 : vector<1x6xf32> to vector<64x6xf32>
    %9 = arith.addf %6, %8 : vector<64x6xf32>
    %cst_10 = arith.constant 0.000000e+00 : f32
    %10 = vector.broadcast %cst_10 : f32 to vector<64x6xf32>
    %11 = arith.maximumf %9, %10 : vector<64x6xf32>
    %c0_11 = arith.constant 0 : index
    %c0_12 = arith.constant 0 : index
    %12 = vector.load %arg6[%c0_11, %c0_12] : memref<6x6xf32, #tpu.memory_space<vmem>>, vector<6x6xf32>
    %cst_13 = arith.constant dense<0.000000e+00> : vector<64x6xf32>
    %13 = tpu.matmul %11, %12, %cst_13 {dimension_numbers = #tpu.dot_dimension_numbers<[1], [0], [0], [1], [0, 0, 1, 1], [], []>} : vector<64x6xf32>, vector<6x6xf32>, vector<64x6xf32> -> vector<64x6xf32>
    %c0_14 = arith.constant 0 : index
    %c0_15 = arith.constant 0 : index
    %14 = vector.load %arg7[%c0_14, %c0_15] : memref<1x6xf32, #tpu.memory_space<vmem>>, vector<1x6xf32>
    %15 = vector.broadcast %14 : vector<1x6xf32> to vector<64x6xf32>
    %16 = arith.addf %13, %15 : vector<64x6xf32>
    %cst_16 = arith.constant 0.000000e+00 : f32
    %17 = vector.broadcast %cst_16 : f32 to vector<64x6xf32>
    %18 = arith.maximumf %16, %17 : vector<64x6xf32>
    %c0_17 = arith.constant 0 : index
    %c0_18 = arith.constant 0 : index
    %19 = vector.load %arg8[%c0_17, %c0_18] : memref<6x1xf32, #tpu.memory_space<vmem>>, vector<6x1xf32>
    %cst_19 = arith.constant dense<0.000000e+00> : vector<64x1xf32>
    %20 = tpu.matmul %18, %19, %cst_19 {dimension_numbers = #tpu.dot_dimension_numbers<[1], [0], [0], [1], [0, 0, 1, 1], [], []>} : vector<64x6xf32>, vector<6x1xf32>, vector<64x1xf32> -> vector<64x1xf32>
    %c0_20 = arith.constant 0 : index
    %c0_21 = arith.constant 0 : index
    %21 = vector.load %arg9[%c0_20, %c0_21] : memref<1x1xf32, #tpu.memory_space<vmem>>, vector<1x1xf32>
    %22 = vector.broadcast %21 : vector<1x1xf32> to vector<64x1xf32>
    %23 = arith.addf %20, %22 : vector<64x1xf32>
    %c0_22 = arith.constant 0 : index
    %c0_23 = arith.constant 0 : index
    %24 = vector.load %arg10[%c0_22, %c0_23] : memref<64x1xf32, #tpu.memory_space<vmem>>, vector<64x1xf32>
    tpu.vector_store %arg10[%c0_22, %c0_23], %23 {strides = array<i32>} : memref<64x1xf32, #tpu.memory_space<vmem>>, vector<64x1xf32>,
    return
  }
  func.func @transform_0(%arg0: i32) -> (i32, i32) {
    %c0_i32 = arith.constant 0 : i32
    %c0_i32_0 = arith.constant 0 : i32
    return %arg0, %c0_i32 : i32, i32
  }
  func.func @transform_1(%arg0: i32) -> (i32, i32) {
    %c0_i32 = arith.constant 0 : i32
    %c0_i32_0 = arith.constant 0 : i32
    return %arg0, %c0_i32 : i32, i32
  }
  func.func @transform_2(%arg0: i32) -> (i32, i32) {
    %c0_i32 = arith.constant 0 : i32
    %c0_i32_0 = arith.constant 0 : i32
    %c0_i32_1 = arith.constant 0 : i32
    return %c0_i32, %c0_i32_0 : i32, i32
  }
  func.func @transform_3(%arg0: i32) -> (i32, i32) {
    %c0_i32 = arith.constant 0 : i32
    %c0_i32_0 = arith.constant 0 : i32
    %c0_i32_1 = arith.constant 0 : i32
    return %c0_i32, %c0_i32_0 : i32, i32
  }
  func.func @transform_4(%arg0: i32) -> (i32, i32) {
    %c0_i32 = arith.constant 0 : i32
    %c0_i32_0 = arith.constant 0 : i32
    %c0_i32_1 = arith.constant 0 : i32
    return %c0_i32, %c0_i32_0 : i32, i32
  }
  func.func @transform_5(%arg0: i32) -> (i32, i32) {
    %c0_i32 = arith.constant 0 : i32
    %c0_i32_0 = arith.constant 0 : i32
    %c0_i32_1 = arith.constant 0 : i32
    return %c0_i32, %c0_i32_0 : i32, i32
  }
  func.func @transform_6(%arg0: i32) -> (i32, i32) {
    %c0_i32 = arith.constant 0 : i32
    %c0_i32_0 = arith.constant 0 : i32
    %c0_i32_1 = arith.constant 0 : i32
    return %c0_i32, %c0_i32_0 : i32, i32
  }
  func.func @transform_7(%arg0: i32) -> (i32, i32) {
    %c0_i32 = arith.constant 0 : i32
    %c0_i32_0 = arith.constant 0 : i32
    %c0_i32_1 = arith.constant 0 : i32
    return %c0_i32, %c0_i32_0 : i32, i32
  }
  func.func @transform_8(%arg0: i32) -> (i32, i32) {
    %c0_i32 = arith.constant 0 : i32
    %c0_i32_0 = arith.constant 0 : i32
    %c0_i32_1 = arith.constant 0 : i32
    return %c0_i32, %c0_i32_0 : i32, i32
  }
  func.func @transform_9(%arg0: i32) -> (i32, i32) {
    %c0_i32 = arith.constant 0 : i32
    %c0_i32_0 = arith.constant 0 : i32
    return %arg0, %c0_i32 : i32, i32
  }
}

</mosaic_0001>

<llo_original>
// kernel: tpu_custom_call.1
$region0: #{tpu_custom_call.1}
  #allocation0 [shape = 'u32[]', space=smem, size = 0x4, offset = 0x4, fixed_abs, tag = 'smem constant byte address 0x4 - core index']
  #allocation1 [shape = 'u32[144,128]{1,0:T(1,128)}', space=vmem, size = 0x12000, scoped, tag = 'internal scratch']
  #allocation2 [shape = 'f32[1,1]{1,0:T(1,128)S(1)}', space=vmem, size = 0x200, scoped, tag = 'scoped memory for tpu_custom_call.1']
  %s0 = inlined_call_operand.vmem [shape: f32[200,6], index: 0, kind: input, shape index: {}]
  %s1 = inlined_call_operand.vmem [shape: f32[200,4], index: 1, kind: input, shape index: {}]
  %s2 = inlined_call_operand.vmem [shape: f32[6,6], index: 2, kind: input, shape index: {}]
  %s3 = inlined_call_operand.vmem [shape: f32[4,6], index: 3, kind: input, shape index: {}]
  %s4 = inlined_call_operand.vmem [shape: f32[1,6], index: 4, kind: input, shape index: {}]
  %s5 = inlined_call_operand.vmem [shape: f32[6,6], index: 5, kind: input, shape index: {}]
  %s6 = inlined_call_operand.vmem [shape: f32[1,6], index: 6, kind: input, shape index: {}]
  %s7 = inlined_call_operand.vmem [shape: f32[6,1], index: 7, kind: input, shape index: {}]
  %s8 = inlined_call_operand.<no memory space> [shape: f32[1,1], index: 8, kind: input, shape index: {}]
  %s9 = inlined_call_operand.vmem [shape: f32[200,1], index: 9, kind: output, shape index: {}]
  %s10 = sld [smem:[#allocation0]]
  $region117: #{tpu_custom_call.1} parent=0
    _
  %s12 = ssub.s32 1, %s10
  %s13 = scalar_select 0, %s12, %s10
  %v14 = vstv %s8
  %15 = vst [vmem:[#allocation2] sm:$0x1] %v14
  $region1: #{tpu_custom_call.1} parent=0
    #allocation3 [shape = 'u8[65536]{0}', space=vmem, size = 0x10000, scoped, tag = 'output window, operand 0']
    loop: start=0, step=1, limit=6
    $region2: #{tpu_custom_call.1} parent=1 // loop_pre_header
      _
    $region3: #{tpu_custom_call.1} parent=1 // loop_header
      %s17 = sphi 0, %s21
      %p18 = scmp.ge.s32.totalorder %s17, 6
      %s27 = sphi 0, %s29
      %s30 = sphi 0, %s27
      %s31 = sphi 0, %s30
      %s47 = sphi 0, %s31
      %s53 = sphi 0, %s55
      %s56 = sphi 0, %s53
      %s57 = sphi 0, %s56
      %s73 = sphi 0, %s57
      %s77 = sphi 0, %s77
      %s79 = sphi 0, %s77
      %s80 = sphi 0, %s79
      %s94 = sphi 0, %s80
      %s98 = sphi 0, %s98
      %s100 = sphi 0, %s98
      %s101 = sphi 0, %s100
      %s115 = sphi 0, %s101
      %s119 = sphi 0, %s119
      %s121 = sphi 0, %s119
      %s122 = sphi 0, %s121
      %s136 = sphi 0, %s122
      %s140 = sphi 0, %s140
      %s142 = sphi 0, %s140
      %s143 = sphi 0, %s142
      %s157 = sphi 0, %s143
      %s161 = sphi 0, %s161
      %s163 = sphi 0, %s161
      %s164 = sphi 0, %s163
      %s178 = sphi 0, %s164
      %s182 = sphi 0, %s182
      %s184 = sphi 0, %s182
      %s185 = sphi 0, %s184
      %s199 = sphi 0, %s185
      %s203 = sphi 0, %s203
      %s205 = sphi 0, %s203
      %s206 = sphi 0, %s205
      %s220 = sphi 0, %s206
      %s226 = sphi 0, %s228
      %s229 = sphi 0, %s226
      %s230 = sphi 0, %s229
      %s246 = sphi 0, %s230
    $region4: #{tpu_custom_call.1} parent=1 // loop_header_branch
      %20 = sbr.rel (%p18) target = $region8
    $region5: #{tpu_custom_call.1} parent=1 // loop_body
      %s22 = ssub.s32 %s17, 1
      %s23 = ssub.s32 %s17, 2
      %s24 = sadd.s32 %s17, 1
      %s25 = ssub.s32 %s17, %s24
      %p26 = scmp.eq.s32.totalorder %s25, 0
      %s28 = sadd.s32 %s27, 1
      %s29 = scalar_select %p26, %s27, %s28
      %p32 = pneg %p26
      %p33 = scmp.eq.s32.totalorder %s17, 3
      %p34 = por %p32, %p33
      %p35 = scmp.ne.s32.totalorder %s27, %s30
      %p36 = scmp.eq.s32.totalorder %s17, 0
      %p37 = por %p35, %p36
      %p38 = scmp.ne.s32.totalorder %s27, %s30
      %p39 = scmp.eq.s32.totalorder %s22, 3
      %p40 = por %p38, %p39
      %p41 = scmp.ne.s32.totalorder %s30, %s31
      %p42 = scmp.eq.s32.totalorder %s22, 0
      %p43 = por %p41, %p42
      %p44 = scmp.ne.s32.totalorder %s30, %s31
      %p45 = scmp.eq.s32.totalorder %s23, 3
      %p46 = por %p44, %p45
      %p48 = scmp.ne.s32.totalorder %s31, %s47
      %p49 = scmp.eq.s32.totalorder %s23, 0
      %p50 = por %p48, %p49
      %s51 = ssub.s32 %s17, %s24
      %p52 = scmp.eq.s32.totalorder %s51, 0
      %s54 = sadd.s32 %s53, 1
      %s55 = scalar_select %p52, %s53, %s54
      %p58 = pneg %p52
      %p59 = scmp.eq.s32.totalorder %s17, 3
      %p60 = por %p58, %p59
      %p61 = scmp.ne.s32.totalorder %s53, %s56
      %p62 = scmp.eq.s32.totalorder %s17, 0
      %p63 = por %p61, %p62
      %p64 = scmp.ne.s32.totalorder %s53, %s56
      %p65 = scmp.eq.s32.totalorder %s22, 3
      %p66 = por %p64, %p65
      %p67 = scmp.ne.s32.totalorder %s56, %s57
      %p68 = scmp.eq.s32.totalorder %s22, 0
      %p69 = por %p67, %p68
      %p70 = scmp.ne.s32.totalorder %s56, %s57
      %p71 = scmp.eq.s32.totalorder %s23, 3
      %p72 = por %p70, %p71
      %p74 = scmp.ne.s32.totalorder %s57, %s73
      %p75 = scmp.eq.s32.totalorder %s23, 0
      %p76 = por %p74, %p75
      %s78 = sadd.s32 %s77, 1
      %p81 = scmp.eq.s32.totalorder %s17, 3
      %p82 = scmp.ne.s32.totalorder %s77, %s79
      %p83 = scmp.eq.s32.totalorder %s17, 0
      %p84 = por %p82, %p83
      %p85 = scmp.ne.s32.totalorder %s77, %s79
      %p86 = scmp.eq.s32.totalorder %s22, 3
      %p87 = por %p85, %p86
      %p88 = scmp.ne.s32.totalorder %s79, %s80
      %p89 = scmp.eq.s32.totalorder %s22, 0
      %p90 = por %p88, %p89
      %p91 = scmp.ne.s32.totalorder %s79, %s80
      %p92 = scmp.eq.s32.totalorder %s23, 3
      %p93 = por %p91, %p92
      %p95 = scmp.ne.s32.totalorder %s80, %s94
      %p96 = scmp.eq.s32.totalorder %s23, 0
      %p97 = por %p95, %p96
      %s99 = sadd.s32 %s98, 1
      %p102 = scmp.eq.s32.totalorder %s17, 3
      %p103 = scmp.ne.s32.totalorder %s98, %s100
      %p104 = scmp.eq.s32.totalorder %s17, 0
      %p105 = por %p103, %p104
      %p106 = scmp.ne.s32.totalorder %s98, %s100
      %p107 = scmp.eq.s32.totalorder %s22, 3
      %p108 = por %p106, %p107
      %p109 = scmp.ne.s32.totalorder %s100, %s101
      %p110 = scmp.eq.s32.totalorder %s22, 0
      %p111 = por %p109, %p110
      %p112 = scmp.ne.s32.totalorder %s100, %s101
      %p113 = scmp.eq.s32.totalorder %s23, 3
      %p114 = por %p112, %p113
      %p116 = scmp.ne.s32.totalorder %s101, %s115
      %p117 = scmp.eq.s32.totalorder %s23, 0
      %p118 = por %p116, %p117
      %s120 = sadd.s32 %s119, 1
      %p123 = scmp.eq.s32.totalorder %s17, 3
      %p124 = scmp.ne.s32.totalorder %s119, %s121
      %p125 = scmp.eq.s32.totalorder %s17, 0
      %p126 = por %p124, %p125
      %p127 = scmp.ne.s32.totalorder %s119, %s121
      %p128 = scmp.eq.s32.totalorder %s22, 3
      %p129 = por %p127, %p128
      %p130 = scmp.ne.s32.totalorder %s121, %s122
      %p131 = scmp.eq.s32.totalorder %s22, 0
      %p132 = por %p130, %p131
      %p133 = scmp.ne.s32.totalorder %s121, %s122
      %p134 = scmp.eq.s32.totalorder %s23, 3
      %p135 = por %p133, %p134
      %p137 = scmp.ne.s32.totalorder %s122, %s136
      %p138 = scmp.eq.s32.totalorder %s23, 0
      %p139 = por %p137, %p138
      %s141 = sadd.s32 %s140, 1
      %p144 = scmp.eq.s32.totalorder %s17, 3
      %p145 = scmp.ne.s32.totalorder %s140, %s142
      %p146 = scmp.eq.s32.totalorder %s17, 0
      %p147 = por %p145, %p146
      %p148 = scmp.ne.s32.totalorder %s140, %s142
      %p149 = scmp.eq.s32.totalorder %s22, 3
      %p150 = por %p148, %p149
      %p151 = scmp.ne.s32.totalorder %s142, %s143
      %p152 = scmp.eq.s32.totalorder %s22, 0
      %p153 = por %p151, %p152
      %p154 = scmp.ne.s32.totalorder %s142, %s143
      %p155 = scmp.eq.s32.totalorder %s23, 3
      %p156 = por %p154, %p155
      %p158 = scmp.ne.s32.totalorder %s143, %s157
      %p159 = scmp.eq.s32.totalorder %s23, 0
      %p160 = por %p158, %p159
      %s162 = sadd.s32 %s161, 1
      %p165 = scmp.eq.s32.totalorder %s17, 3
      %p166 = scmp.ne.s32.totalorder %s161, %s163
      %p167 = scmp.eq.s32.totalorder %s17, 0
      %p168 = por %p166, %p167
      %p169 = scmp.ne.s32.totalorder %s161, %s163
      %p170 = scmp.eq.s32.totalorder %s22, 3
      %p171 = por %p169, %p170
      %p172 = scmp.ne.s32.totalorder %s163, %s164
      %p173 = scmp.eq.s32.totalorder %s22, 0
      %p174 = por %p172, %p173
      %p175 = scmp.ne.s32.totalorder %s163, %s164
      %p176 = scmp.eq.s32.totalorder %s23, 3
      %p177 = por %p175, %p176
      %p179 = scmp.ne.s32.totalorder %s164, %s178
      %p180 = scmp.eq.s32.totalorder %s23, 0
      %p181 = por %p179, %p180
      %s183 = sadd.s32 %s182, 1
      %p186 = scmp.eq.s32.totalorder %s17, 3
      %p187 = scmp.ne.s32.totalorder %s182, %s184
      %p188 = scmp.eq.s32.totalorder %s17, 0
      %p189 = por %p187, %p188
      %p190 = scmp.ne.s32.totalorder %s182, %s184
      %p191 = scmp.eq.s32.totalorder %s22, 3
      %p192 = por %p190, %p191
      %p193 = scmp.ne.s32.totalorder %s184, %s185
      %p194 = scmp.eq.s32.totalorder %s22, 0
      %p195 = por %p193, %p194
      %p196 = scmp.ne.s32.totalorder %s184, %s185
      %p197 = scmp.eq.s32.totalorder %s23, 3
      %p198 = por %p196, %p197
      %p200 = scmp.ne.s32.totalorder %s185, %s199
      %p201 = scmp.eq.s32.totalorder %s23, 0
      %p202 = por %p200, %p201
      %s204 = sadd.s32 %s203, 1
      %p207 = scmp.eq.s32.totalorder %s17, 3
      %p208 = scmp.ne.s32.totalorder %s203, %s205
      %p209 = scmp.eq.s32.totalorder %s17, 0
      %p210 = por %p208, %p209
      %p211 = scmp.ne.s32.totalorder %s203, %s205
      %p212 = scmp.eq.s32.totalorder %s22, 3
      %p213 = por %p211, %p212
      %p214 = scmp.ne.s32.totalorder %s205, %s206
      %p215 = scmp.eq.s32.totalorder %s22, 0
      %p216 = por %p214, %p215
      %p217 = scmp.ne.s32.totalorder %s205, %s206
      %p218 = scmp.eq.s32.totalorder %s23, 3
      %p219 = por %p217, %p218
      %p221 = scmp.ne.s32.totalorder %s206, %s220
      %p222 = scmp.eq.s32.totalorder %s23, 0
      %p223 = por %p221, %p222
      %s224 = ssub.s32 %s17, %s24
      %p225 = scmp.eq.s32.totalorder %s224, 0
      %s227 = sadd.s32 %s226, 1
      %s228 = scalar_select %p225, %s226, %s227
      %p231 = pneg %p225
      %p232 = scmp.eq.s32.totalorder %s17, 3
      %p233 = por %p231, %p232
      %p234 = scmp.ne.s32.totalorder %s226, %s229
      %p235 = scmp.eq.s32.totalorder %s17, 0
      %p236 = por %p234, %p235
      %p237 = scmp.ne.s32.totalorder %s226, %s229
      %p238 = scmp.eq.s32.totalorder %s22, 3
      %p239 = por %p237, %p238
      %p240 = scmp.ne.s32.totalorder %s229, %s230
      %p241 = scmp.eq.s32.totalorder %s22, 0
      %p242 = por %p240, %p241
      %p243 = scmp.ne.s32.totalorder %s229, %s230
      %p244 = scmp.eq.s32.totalorder %s23, 3
      %p245 = por %p243, %p244
      %p247 = scmp.ne.s32.totalorder %s230, %s246
      %p248 = scmp.eq.s32.totalorder %s23, 0
      %p249 = por %p247, %p248
      %p250 = scmp.le.s32.totalorder 1, %s17
      %p251 = scmp.lt.s32.totalorder %s17, 5
      %p252 = pnand %p250, %p251
      %p253 = pneg %p252
      // Predicated region
      $region9: #{tpu_custom_call.1} parent=5 // pred_check
        _
      $region10: #{tpu_custom_call.1} parent=5 // pred_check_branch
        %255 = sbr.rel (%p252) target = $region12
      $region11: #{tpu_custom_call.1} parent=5 // pred_region
        %s256 = ssub.s32 %s17, 1
        // Predicated region
        $region13: #{tpu_custom_call.1} parent=11 // pred_check
          %p257 = pneg %p90
        $region14: #{tpu_custom_call.1} parent=11 // pred_check_branch
          %259 = sbr.rel (%p257) target = $region16
        $region15: #{tpu_custom_call.1} parent=11 // pred_region
          _
        $region16: #{tpu_custom_call.1} parent=11 // pred_fallthru
          _
        // Predicated region
        $region17: #{tpu_custom_call.1} parent=11 // pred_check
          %p260 = pneg %p111
        $region18: #{tpu_custom_call.1} parent=11 // pred_check_branch
          %262 = sbr.rel (%p260) target = $region20
        $region19: #{tpu_custom_call.1} parent=11 // pred_region
          _
        $region20: #{tpu_custom_call.1} parent=11 // pred_fallthru
          _
        // Predicated region
        $region21: #{tpu_custom_call.1} parent=11 // pred_check
          %p263 = pneg %p132
        $region22: #{tpu_custom_call.1} parent=11 // pred_check_branch
          %265 = sbr.rel (%p263) target = $region24
        $region23: #{tpu_custom_call.1} parent=11 // pred_region
          _
        $region24: #{tpu_custom_call.1} parent=11 // pred_fallthru
          _
        // Predicated region
        $region25: #{tpu_custom_call.1} parent=11 // pred_check
          %p266 = pneg %p153
        $region26: #{tpu_custom_call.1} parent=11 // pred_check_branch
          %268 = sbr.rel (%p266) target = $region28
        $region27: #{tpu_custom_call.1} parent=11 // pred_region
          _
        $region28: #{tpu_custom_call.1} parent=11 // pred_fallthru
          _
        // Predicated region
        $region29: #{tpu_custom_call.1} parent=11 // pred_check
          %p269 = pneg %p174
        $region30: #{tpu_custom_call.1} parent=11 // pred_check_branch
          %271 = sbr.rel (%p269) target = $region32
        $region31: #{tpu_custom_call.1} parent=11 // pred_region
          _
        $region32: #{tpu_custom_call.1} parent=11 // pred_fallthru
          _
        // Predicated region
        $region33: #{tpu_custom_call.1} parent=11 // pred_check
          %p272 = pneg %p195
        $region34: #{tpu_custom_call.1} parent=11 // pred_check_branch
          %274 = sbr.rel (%p272) target = $region36
        $region35: #{tpu_custom_call.1} parent=11 // pred_region
          _
        $region36: #{tpu_custom_call.1} parent=11 // pred_fallthru
          _
        // Predicated region
        $region37: #{tpu_custom_call.1} parent=11 // pred_check
          %p275 = pneg %p216
        $region38: #{tpu_custom_call.1} parent=11 // pred_check_branch
          %277 = sbr.rel (%p275) target = $region40
        $region39: #{tpu_custom_call.1} parent=11 // pred_region
          _
        $region40: #{tpu_custom_call.1} parent=11 // pred_fallthru
          _
      $region12: #{tpu_custom_call.1} parent=5 // pred_fallthru
        _
      %p278 = scmp.lt.s32.totalorder %s17, 4
      // Predicated region
      $region41: #{tpu_custom_call.1} parent=5 // pred_check
        %p279 = pneg %p278
      $region42: #{tpu_custom_call.1} parent=5 // pred_check_branch
        %281 = sbr.rel (%p279) target = $region44
      $region43: #{tpu_custom_call.1} parent=5 // pred_region
        // Predicated region
        $region45: #{tpu_custom_call.1} parent=43 // pred_check
          %p282 = pneg %p37
        $region46: #{tpu_custom_call.1} parent=43 // pred_check_branch
          %284 = sbr.rel (%p282) target = $region48
        $region47: #{tpu_custom_call.1} parent=43 // pred_region
          %s285 = smul.u32 8, %s17
          %s286 = ssub.s32 25, %s285
          %p287 = scmp.lt.s32.totalorder %s286, 8
          %s288 = scalar_select %p287, %s286, 8
          %s289 = smul.u32 128, %s288
          %p290 = scmp.lt.s32.totalorder %s285, 24
          %s291 = scalar_select %p290, %s285, 24
          %s292 = smul.addr %s291, 8
          %s293 = scalar_lea.vmem %s0, %s292
          %s294 = smul.u32 8, %s17
          %s295 = ssub.s32 25, %s294
          %p296 = scmp.lt.s32.totalorder %s295, 8
          %s297 = scalar_select %p296, %s295, 8
          %s298 = smul.u32 128, %s297
        $region48: #{tpu_custom_call.1} parent=43 // pred_fallthru
          _
        // Predicated region
        $region49: #{tpu_custom_call.1} parent=43 // pred_check
          %p299 = pneg %p63
        $region50: #{tpu_custom_call.1} parent=43 // pred_check_branch
          %301 = sbr.rel (%p299) target = $region52
        $region51: #{tpu_custom_call.1} parent=43 // pred_region
          %s302 = smul.u32 8, %s17
          %s303 = ssub.s32 25, %s302
          %p304 = scmp.lt.s32.totalorder %s303, 8
          %s305 = scalar_select %p304, %s303, 8
          %s306 = smul.u32 128, %s305
          %p307 = scmp.lt.s32.totalorder %s302, 24
          %s308 = scalar_select %p307, %s302, 24
          %s309 = smul.addr %s308, 8
          %s310 = scalar_lea.vmem %s1, %s309
          %s311 = smul.u32 8, %s17
          %s312 = ssub.s32 25, %s311
          %p313 = scmp.lt.s32.totalorder %s312, 8
          %s314 = scalar_select %p313, %s312, 8
          %s315 = smul.u32 128, %s314
        $region52: #{tpu_custom_call.1} parent=43 // pred_fallthru
          _
      $region44: #{tpu_custom_call.1} parent=5 // pred_fallthru
        _
      %p316 = scmp.le.s32.totalorder 1, %s17
      %p317 = scmp.lt.s32.totalorder %s17, 5
      %p318 = pnand %p316, %p317
      %p319 = pneg %p318
      // Predicated region
      $region53: #{tpu_custom_call.1} parent=5 // pred_check
        _
      $region54: #{tpu_custom_call.1} parent=5 // pred_check_branch
        %321 = sbr.rel (%p318) target = $region56
      $region55: #{tpu_custom_call.1} parent=5 // pred_region
        %s322 = ssub.s32 %s17, 1
        %s323 = smul.u32 8, %s22
        %s324 = ssub.s32 25, %s323
        %p325 = scmp.lt.s32.totalorder %s324, 8
        %s326 = scalar_select %p325, %s324, 8
        %s327 = smul.u32 128, %s326
        %p328 = scmp.lt.s32.totalorder %s323, 24
        %s329 = scalar_select %p328, %s323, 24
        %s330 = smul.addr %s329, 8
        %s331 = scalar_lea.vmem %s0, %s330
        %p332 = pneg %p43
        %p333 = pneg %p40
        %s334 = smul.u32 8, %s22
        %s335 = ssub.s32 25, %s334
        %p336 = scmp.lt.s32.totalorder %s335, 8
        %s337 = scalar_select %p336, %s335, 8
        %s338 = smul.u32 128, %s337
        %p339 = scmp.lt.s32.totalorder %s334, 24
        %s340 = scalar_select %p339, %s334, 24
        %s341 = smul.addr %s340, 8
        %s342 = scalar_lea.vmem %s1, %s341
        %p343 = pneg %p69
        %p344 = pneg %p66
        %p345 = pneg %p90
        %p346 = pneg %p87
        %p347 = pneg %p111
        %p348 = pneg %p108
        %p349 = pneg %p132
        %p350 = pneg %p129
        %p351 = pneg %p153
        %p352 = pneg %p150
        %p353 = pneg %p174
        %p354 = pneg %p171
        %p355 = pneg %p195
        %p356 = pneg %p192
        %p357 = pneg %p216
        %p358 = pneg %p213
        %p359 = pneg %p242
        %p360 = pneg %p239
        %s361 = sand.u32 %s229, 1
        %s362 = sand.u32 %s229, 1
        %s363 = smul.addr %s362, 64
        %s364 = scalar_lea.vmem [#allocation3], %s363
        %s365 = smul.u32 8, %s22
        %s366 = ssub.s32 25, %s365
        %p367 = scmp.lt.s32.totalorder %s366, 8
        %s368 = scalar_select %p367, %s366, 8
        %s369 = smul.u32 128, %s368
        %p370 = scmp.lt.s32.totalorder %s365, 24
        %s371 = scalar_select %p370, %s365, 24
        %s372 = smul.addr %s371, 8
        %s373 = scalar_lea.vmem %s0, %s372
        %s374 = smul.u32 8, %s22
        %s375 = ssub.s32 25, %s374
        %p376 = scmp.lt.s32.totalorder %s375, 8
        %s377 = scalar_select %p376, %s375, 8
        %s378 = smul.u32 128, %s377
        %s379 = smul.u32 8, %s22
        %s380 = ssub.s32 25, %s379
        %p381 = scmp.lt.s32.totalorder %s380, 8
        %s382 = scalar_select %p381, %s380, 8
        %s383 = smul.u32 128, %s382
        %p384 = scmp.lt.s32.totalorder %s379, 24
        %s385 = scalar_select %p384, %s379, 24
        %s386 = smul.addr %s385, 8
        %s387 = scalar_lea.vmem %s1, %s386
        %s388 = smul.u32 8, %s22
        %s389 = ssub.s32 25, %s388
        %p390 = scmp.lt.s32.totalorder %s389, 8
        %s391 = scalar_select %p390, %s389, 8
        %s392 = smul.u32 128, %s391
        %s393 = smul.u32 8, %s22
        %s394 = ssub.s32 25, %s393
        %p395 = scmp.lt.s32.totalorder %s394, 8
        %s396 = scalar_select %p395, %s394, 8
        %s397 = smul.u32 128, %s396
        %v398 = vld [vmem:[%s373] sm:$0xff]
        %v399 = vld [vmem:[%s373 + $0x8] sm:$0xff]
        %v400 = vld [vmem:[%s373 + $0x10] sm:$0xff]
        %v401 = vld [vmem:[%s373 + $0x18] sm:$0xff]
        %v402 = vld [vmem:[%s373 + $0x20] sm:$0xff]
        %v403 = vld [vmem:[%s373 + $0x28] sm:$0xff]
        %v404 = vld [vmem:[%s373 + $0x30] sm:$0xff]
        %v405 = vld [vmem:[%s373 + $0x38] sm:$0xff]
        %v406 = vld [vmem:[%s387] sm:$0xff]
        %v407 = vld [vmem:[%s387 + $0x8] sm:$0xff]
        %v408 = vld [vmem:[%s387 + $0x10] sm:$0xff]
        %v409 = vld [vmem:[%s387 + $0x18] sm:$0xff]
        %v410 = vld [vmem:[%s387 + $0x20] sm:$0xff]
        %v411 = vld [vmem:[%s387 + $0x28] sm:$0xff]
        %v412 = vld [vmem:[%s387 + $0x30] sm:$0xff]
        %v413 = vld [vmem:[%s387 + $0x38] sm:$0xff]
        %v414 = vld [vmem:[%s2] sm:$0x3f]
        %v415 = vld [vmem:[%s3] sm:$0xf]
        %vm416 = vcmask 31744
        %v418 = vsel %vm416, %v406, 0
        %v421 = vsel %vm416, %v407, 0
        %v424 = vsel %vm416, %v408, 0
        %v427 = vsel %vm416, %v409, 0
        %v430 = vsel %vm416, %v410, 0
        %v433 = vsel %vm416, %v411, 0
        %v436 = vsel %vm416, %v412, 0
        %v439 = vsel %vm416, %v413, 0
        %vm441 = vcmask 1043456
        %v443 = vsel %vm441, %v415, 0
        %445 = vmatprep.subr.mxu0 0.0
        %446 = vmatpush1.msra.mxu0 %v443
        %447 = vmatprep.subr.mxu0 0.0
        %448 = vmatpush1.msra.mxu0 0.0
        %449 = vmatprep.subr.mxu0 0.0
        %450 = vmatpush1.msra.mxu0 0.0
        %451 = vmatprep.subr.mxu0 0.0
        %452 = vmatpush1.msra.mxu0 0.0
        %453 = vmatprep.subr.mxu0 0.0
        %454 = vmatpush1.msra.mxu0 0.0
        %455 = vmatprep.subr.mxu0 0.0
        %456 = vmatpush1.msra.mxu0 0.0
        %457 = vmatprep.subr.mxu0 0.0
        %458 = vmatpush1.msra.mxu0 0.0
        %459 = vmatprep.subr.mxu0 0.0
        %460 = vmatpush1.msra.mxu0 0.0
        %461 = vmatprep.subr.mxu0 0.0
        %462 = vmatpush1.msra.mxu0 0.0
        %463 = vmatprep.subr.mxu0 0.0
        %464 = vmatpush1.msra.mxu0 0.0
        %465 = vmatprep.subr.mxu0 0.0
        %466 = vmatpush1.msra.mxu0 0.0
        %467 = vmatprep.subr.mxu0 0.0
        %468 = vmatpush1.msra.mxu0 0.0
        %469 = vmatprep.subr.mxu0 0.0
        %470 = vmatpush1.msra.mxu0 0.0
        %471 = vmatprep.subr.mxu0 0.0
        %472 = vmatpush1.msra.mxu0 0.0
        %473 = vmatprep.subr.mxu0 0.0
        %474 = vmatpush1.msra.mxu0 0.0
        %475 = vmatprep.subr.mxu0 0.0
        %476 = vmatpush1.msra.mxu0 0.0
        %477 = vmatprep.subr.mxu0 0.0
        %478 = vmatpush1.msra.mxu0 0.0
        %479 = vmatprep.subr.mxu0 0.0
        %480 = vmatpush1.msra.mxu0 0.0
        %481 = vmatprep.subr.mxu0 0.0
        %482 = vmatpush1.msra.mxu0 0.0
        %483 = vmatprep.subr.mxu0 0.0
        %484 = vmatpush1.msra.mxu0 0.0
        %485 = vmatprep.subr.mxu0 0.0
        %486 = vmatpush1.msra.mxu0 0.0
        %487 = vmatprep.subr.mxu0 0.0
        %488 = vmatpush1.msra.mxu0 0.0
        %489 = vmatprep.subr.mxu0 0.0
        %490 = vmatpush1.msra.mxu0 0.0
        %491 = vmatprep.subr.mxu0 0.0
        %492 = vmatpush1.msra.mxu0 0.0
        %493 = vmatprep.subr.mxu0 0.0
        %494 = vmatpush1.msra.mxu0 0.0
        %495 = vmatprep.subr.mxu0 0.0
        %496 = vmatpush1.msra.mxu0 0.0
        %497 = vmatprep.subr.mxu0 0.0
        %498 = vmatpush1.msra.mxu0 0.0
        %499 = vmatprep.subr.mxu0 0.0
        %500 = vmatpush1.msra.mxu0 0.0
        %501 = vmatprep.subr.mxu0 0.0
        %502 = vmatpush1.msra.mxu0 0.0
        %503 = vmatprep.subr.mxu0 0.0
        %504 = vmatpush1.msra.mxu0 0.0
        %505 = vmatprep.subr.mxu0 0.0
        %506 = vmatpush1.msra.mxu0 0.0
        %507 = vmatprep.subr.mxu0 0.0
        %508 = vmatpush1.msra.mxu0 0.0
        %509 = vmatprep.mubr.f32.mxu0 0.0
        %510 = vmatmul.mubr.f32.gmra.mrb[0].mxu0 %v418
        %v511 = vpop.f32.mrb[0].mxu0
        %v512 = vadd.f32 0.0, %v511
        %v513 = vpop.f32.mrb[0].mxu0
        %514 = vmatprep.mubr.f32.mxu0 0.0
        %515 = vmatmul.mubr.f32.gmra.mrb[0].mxu0 %v421
        %v516 = vpop.f32.mrb[0].mxu0
        %v517 = vadd.f32 0.0, %v516
        %v518 = vpop.f32.mrb[0].mxu0
        %519 = vmatprep.mubr.f32.mxu0 0.0
        %520 = vmatmul.mubr.f32.gmra.mrb[0].mxu0 %v424
        %v521 = vpop.f32.mrb[0].mxu0
        %v522 = vadd.f32 0.0, %v521
        %v523 = vpop.f32.mrb[0].mxu0
        %524 = vmatprep.mubr.f32.mxu0 0.0
        %525 = vmatmul.mubr.f32.gmra.mrb[0].mxu0 %v427
        %v526 = vpop.f32.mrb[0].mxu0
        %v527 = vadd.f32 0.0, %v526
        %v528 = vpop.f32.mrb[0].mxu0
        %529 = vmatprep.mubr.f32.mxu0 0.0
        %530 = vmatmul.mubr.f32.gmra.mrb[0].mxu0 %v430
        %v531 = vpop.f32.mrb[0].mxu0
        %v532 = vadd.f32 0.0, %v531
        %v533 = vpop.f32.mrb[0].mxu0
        %534 = vmatprep.mubr.f32.mxu0 0.0
        %535 = vmatmul.mubr.f32.gmra.mrb[0].mxu0 %v433
        %v536 = vpop.f32.mrb[0].mxu0
        %v537 = vadd.f32 0.0, %v536
        %v538 = vpop.f32.mrb[0].mxu0
        %539 = vmatprep.mubr.f32.mxu0 0.0
        %540 = vmatmul.mubr.f32.gmra.mrb[0].mxu0 %v436
        %v541 = vpop.f32.mrb[0].mxu0
        %v542 = vadd.f32 0.0, %v541
        %v543 = vpop.f32.mrb[0].mxu0
        %544 = vmatprep.mubr.f32.mxu0 0.0
        %545 = vmatmul.mubr.f32.gmra.mrb[0].mxu0 %v439
        %v546 = vpop.f32.mrb[0].mxu0
        %v547 = vadd.f32 0.0, %v546
        %v548 = vpop.f32.mrb[0].mxu0
        %549 = vdwg.mxu0
        %vm550 = vcmask 48128
        %v552 = vsel %vm550, %v398, 0
        %v555 = vsel %vm550, %v399, 0
        %v558 = vsel %vm550, %v400, 0
        %v561 = vsel %vm550, %v401, 0
        %v564 = vsel %vm550, %v402, 0
        %v567 = vsel %vm550, %v403, 0
        %v570 = vsel %vm550, %v404, 0
        %v573 = vsel %vm550, %v405, 0
        %vm575 = vcmask 1045504
        %v577 = vsel %vm575, %v414, 0
        %579 = vmatprep.subr.mxu0 0.0
        %580 = vmatpush1.msra.mxu0 %v577
        %581 = vmatprep.subr.mxu0 0.0
        %582 = vmatpush1.msra.mxu0 0.0
        %583 = vmatprep.subr.mxu0 0.0
        %584 = vmatpush1.msra.mxu0 0.0
        %585 = vmatprep.subr.mxu0 0.0
        %586 = vmatpush1.msra.mxu0 0.0
        %587 = vmatprep.subr.mxu0 0.0
        %588 = vmatpush1.msra.mxu0 0.0
        %589 = vmatprep.subr.mxu0 0.0
        %590 = vmatpush1.msra.mxu0 0.0
        %591 = vmatprep.subr.mxu0 0.0
        %592 = vmatpush1.msra.mxu0 0.0
        %593 = vmatprep.subr.mxu0 0.0
        %594 = vmatpush1.msra.mxu0 0.0
        %595 = vmatprep.subr.mxu0 0.0
        %596 = vmatpush1.msra.mxu0 0.0
        %597 = vmatprep.subr.mxu0 0.0
        %598 = vmatpush1.msra.mxu0 0.0
        %599 = vmatprep.subr.mxu0 0.0
        %600 = vmatpush1.msra.mxu0 0.0
        %601 = vmatprep.subr.mxu0 0.0
        %602 = vmatpush1.msra.mxu0 0.0
        %603 = vmatprep.subr.mxu0 0.0
        %604 = vmatpush1.msra.mxu0 0.0
        %605 = vmatprep.subr.mxu0 0.0
        %606 = vmatpush1.msra.mxu0 0.0
        %607 = vmatprep.subr.mxu0 0.0
        %608 = vmatpush1.msra.mxu0 0.0
        %609 = vmatprep.subr.mxu0 0.0
        %610 = vmatpush1.msra.mxu0 0.0
        %611 = vmatprep.subr.mxu0 0.0
        %612 = vmatpush1.msra.mxu0 0.0
        %613 = vmatprep.subr.mxu0 0.0
        %614 = vmatpush1.msra.mxu0 0.0
        %615 = vmatprep.subr.mxu0 0.0
        %616 = vmatpush1.msra.mxu0 0.0
        %617 = vmatprep.subr.mxu0 0.0
        %618 = vmatpush1.msra.mxu0 0.0
        %619 = vmatprep.subr.mxu0 0.0
        %620 = vmatpush1.msra.mxu0 0.0
        %621 = vmatprep.subr.mxu0 0.0
        %622 = vmatpush1.msra.mxu0 0.0
        %623 = vmatprep.subr.mxu0 0.0
        %624 = vmatpush1.msra.mxu0 0.0
        %625 = vmatprep.subr.mxu0 0.0
        %626 = vmatpush1.msra.mxu0 0.0
        %627 = vmatprep.subr.mxu0 0.0
        %628 = vmatpush1.msra.mxu0 0.0
        %629 = vmatprep.subr.mxu0 0.0
        %630 = vmatpush1.msra.mxu0 0.0
        %631 = vmatprep.subr.mxu0 0.0
        %632 = vmatpush1.msra.mxu0 0.0
        %633 = vmatprep.subr.mxu0 0.0
        %634 = vmatpush1.msra.mxu0 0.0
        %635 = vmatprep.subr.mxu0 0.0
        %636 = vmatpush1.msra.mxu0 0.0
        %637 = vmatprep.subr.mxu0 0.0
        %638 = vmatpush1.msra.mxu0 0.0
        %639 = vmatprep.subr.mxu0 0.0
        %640 = vmatpush1.msra.mxu0 0.0
        %641 = vmatprep.subr.mxu0 0.0
        %642 = vmatpush1.msra.mxu0 0.0
        %643 = vmatprep.mubr.f32.mxu0 0.0
        %644 = vmatmul.mubr.f32.gmra.mrb[0].mxu0 %v552
        %v645 = vpop.f32.mrb[0].mxu0
        %v646 = vadd.f32 %v512, %v645
        %v647 = vpop.f32.mrb[0].mxu0
        %648 = vmatprep.mubr.f32.mxu0 0.0
        %649 = vmatmul.mubr.f32.gmra.mrb[0].mxu0 %v555
        %v650 = vpop.f32.mrb[0].mxu0
        %v651 = vadd.f32 %v517, %v650
        %v652 = vpop.f32.mrb[0].mxu0
        %653 = vmatprep.mubr.f32.mxu0 0.0
        %654 = vmatmul.mubr.f32.gmra.mrb[0].mxu0 %v558
        %v655 = vpop.f32.mrb[0].mxu0
        %v656 = vadd.f32 %v522, %v655
        %v657 = vpop.f32.mrb[0].mxu0
        %658 = vmatprep.mubr.f32.mxu0 0.0
        %659 = vmatmul.mubr.f32.gmra.mrb[0].mxu0 %v561
        %v660 = vpop.f32.mrb[0].mxu0
        %v661 = vadd.f32 %v527, %v660
        %v662 = vpop.f32.mrb[0].mxu0
        %663 = vmatprep.mubr.f32.mxu0 0.0
        %664 = vmatmul.mubr.f32.gmra.mrb[0].mxu0 %v564
        %v665 = vpop.f32.mrb[0].mxu0
        %v666 = vadd.f32 %v532, %v665
        %v667 = vpop.f32.mrb[0].mxu0
        %668 = vmatprep.mubr.f32.mxu0 0.0
        %669 = vmatmul.mubr.f32.gmra.mrb[0].mxu0 %v567
        %v670 = vpop.f32.mrb[0].mxu0
        %v671 = vadd.f32 %v537, %v670
        %v672 = vpop.f32.mrb[0].mxu0
        %673 = vmatprep.mubr.f32.mxu0 0.0
        %674 = vmatmul.mubr.f32.gmra.mrb[0].mxu0 %v570
        %v675 = vpop.f32.mrb[0].mxu0
        %v676 = vadd.f32 %v542, %v675
        %v677 = vpop.f32.mrb[0].mxu0
        %678 = vmatprep.mubr.f32.mxu0 0.0
        %679 = vmatmul.mubr.f32.gmra.mrb[0].mxu0 %v573
        %v680 = vpop.f32.mrb[0].mxu0
        %v681 = vadd.f32 %v547, %v680
        %v682 = vpop.f32.mrb[0].mxu0
        %683 = vdwg.mxu0
        %v684 = vld [vmem:[%s4] sm:$0x1]
        %v686 = vlaneseq
        %v687 = vshrl.u32 %v686, 7
        %v688 = vsub.s32 0, %v687
        %v689 = vrot.slane %v684, %v688
        %v691 = vadd.f32 %v646, %v689
        %v692 = vadd.f32 %v651, %v689
        %v693 = vadd.f32 %v656, %v689
        %v694 = vadd.f32 %v661, %v689
        %v695 = vadd.f32 %v666, %v689
        %v696 = vadd.f32 %v671, %v689
        %v697 = vadd.f32 %v676, %v689
        %v698 = vadd.f32 %v681, %v689
        %v699 = vmax.f32 %v691, 0.0
        %v700 = vmax.f32 %v692, 0.0
        %v701 = vmax.f32 %v693, 0.0
        %v702 = vmax.f32 %v694, 0.0
        %v703 = vmax.f32 %v695, 0.0
        %v704 = vmax.f32 %v696, 0.0
        %v705 = vmax.f32 %v697, 0.0
        %v706 = vmax.f32 %v698, 0.0
        %v707 = vld [vmem:[%s5] sm:$0x3f]
        %v708 = vld [vmem:[%s6] sm:$0x1]
        %v710 = vlaneseq
        %v711 = vshrl.u32 %v710, 7
        %v712 = vsub.s32 0, %v711
        %v713 = vrot.slane %v708, %v712
        %v716 = vsel %vm550, %v699, 0
        %v719 = vsel %vm550, %v700, 0
        %v722 = vsel %vm550, %v701, 0
        %v725 = vsel %vm550, %v702, 0
        %v728 = vsel %vm550, %v703, 0
        %v731 = vsel %vm550, %v704, 0
        %v734 = vsel %vm550, %v705, 0
        %v737 = vsel %vm550, %v706, 0
        %v740 = vsel %vm575, %v707, 0
        %742 = vmatprep.subr.mxu0 0.0
        %743 = vmatpush1.msra.mxu0 %v740
        %744 = vmatprep.subr.mxu0 0.0
        %745 = vmatpush1.msra.mxu0 0.0
        %746 = vmatprep.subr.mxu0 0.0
        %747 = vmatpush1.msra.mxu0 0.0
        %748 = vmatprep.subr.mxu0 0.0
        %749 = vmatpush1.msra.mxu0 0.0
        %750 = vmatprep.subr.mxu0 0.0
        %751 = vmatpush1.msra.mxu0 0.0
        %752 = vmatprep.subr.mxu0 0.0
        %753 = vmatpush1.msra.mxu0 0.0
        %754 = vmatprep.subr.mxu0 0.0
        %755 = vmatpush1.msra.mxu0 0.0
        %756 = vmatprep.subr.mxu0 0.0
        %757 = vmatpush1.msra.mxu0 0.0
        %758 = vmatprep.subr.mxu0 0.0
        %759 = vmatpush1.msra.mxu0 0.0
        %760 = vmatprep.subr.mxu0 0.0
        %761 = vmatpush1.msra.mxu0 0.0
        %762 = vmatprep.subr.mxu0 0.0
        %763 = vmatpush1.msra.mxu0 0.0
        %764 = vmatprep.subr.mxu0 0.0
        %765 = vmatpush1.msra.mxu0 0.0
        %766 = vmatprep.subr.mxu0 0.0
        %767 = vmatpush1.msra.mxu0 0.0
        %768 = vmatprep.subr.mxu0 0.0
        %769 = vmatpush1.msra.mxu0 0.0
        %770 = vmatprep.subr.mxu0 0.0
        %771 = vmatpush1.msra.mxu0 0.0
        %772 = vmatprep.subr.mxu0 0.0
        %773 = vmatpush1.msra.mxu0 0.0
        %774 = vmatprep.subr.mxu0 0.0
        %775 = vmatpush1.msra.mxu0 0.0
        %776 = vmatprep.subr.mxu0 0.0
        %777 = vmatpush1.msra.mxu0 0.0
        %778 = vmatprep.subr.mxu0 0.0
        %779 = vmatpush1.msra.mxu0 0.0
        %780 = vmatprep.subr.mxu0 0.0
        %781 = vmatpush1.msra.mxu0 0.0
        %782 = vmatprep.subr.mxu0 0.0
        %783 = vmatpush1.msra.mxu0 0.0
        %784 = vmatprep.subr.mxu0 0.0
        %785 = vmatpush1.msra.mxu0 0.0
        %786 = vmatprep.subr.mxu0 0.0
        %787 = vmatpush1.msra.mxu0 0.0
        %788 = vmatprep.subr.mxu0 0.0
        %789 = vmatpush1.msra.mxu0 0.0
        %790 = vmatprep.subr.mxu0 0.0
        %791 = vmatpush1.msra.mxu0 0.0
        %792 = vmatprep.subr.mxu0 0.0
        %793 = vmatpush1.msra.mxu0 0.0
        %794 = vmatprep.subr.mxu0 0.0
        %795 = vmatpush1.msra.mxu0 0.0
        %796 = vmatprep.subr.mxu0 0.0
        %797 = vmatpush1.msra.mxu0 0.0
        %798 = vmatprep.subr.mxu0 0.0
        %799 = vmatpush1.msra.mxu0 0.0
        %800 = vmatprep.subr.mxu0 0.0
        %801 = vmatpush1.msra.mxu0 0.0
        %802 = vmatprep.subr.mxu0 0.0
        %803 = vmatpush1.msra.mxu0 0.0
        %804 = vmatprep.subr.mxu0 0.0
        %805 = vmatpush1.msra.mxu0 0.0
        %806 = vmatprep.mubr.f32.mxu0 0.0
        %807 = vmatmul.mubr.f32.gmra.mrb[0].mxu0 %v716
        %v808 = vpop.f32.mrb[0].mxu0
        %v809 = vadd.f32 %v713, %v808
        %v810 = vpop.f32.mrb[0].mxu0
        %811 = vmatprep.mubr.f32.mxu0 0.0
        %812 = vmatmul.mubr.f32.gmra.mrb[0].mxu0 %v719
        %v813 = vpop.f32.mrb[0].mxu0
        %v814 = vadd.f32 %v713, %v813
        %v815 = vpop.f32.mrb[0].mxu0
        %816 = vmatprep.mubr.f32.mxu0 0.0
        %817 = vmatmul.mubr.f32.gmra.mrb[0].mxu0 %v722
        %v818 = vpop.f32.mrb[0].mxu0
        %v819 = vadd.f32 %v713, %v818
        %v820 = vpop.f32.mrb[0].mxu0
        %821 = vmatprep.mubr.f32.mxu0 0.0
        %822 = vmatmul.mubr.f32.gmra.mrb[0].mxu0 %v725
        %v823 = vpop.f32.mrb[0].mxu0
        %v824 = vadd.f32 %v713, %v823
        %v825 = vpop.f32.mrb[0].mxu0
        %826 = vmatprep.mubr.f32.mxu0 0.0
        %827 = vmatmul.mubr.f32.gmra.mrb[0].mxu0 %v728
        %v828 = vpop.f32.mrb[0].mxu0
        %v829 = vadd.f32 %v713, %v828
        %v830 = vpop.f32.mrb[0].mxu0
        %831 = vmatprep.mubr.f32.mxu0 0.0
        %832 = vmatmul.mubr.f32.gmra.mrb[0].mxu0 %v731
        %v833 = vpop.f32.mrb[0].mxu0
        %v834 = vadd.f32 %v713, %v833
        %v835 = vpop.f32.mrb[0].mxu0
        %836 = vmatprep.mubr.f32.mxu0 0.0
        %837 = vmatmul.mubr.f32.gmra.mrb[0].mxu0 %v734
        %v838 = vpop.f32.mrb[0].mxu0
        %v839 = vadd.f32 %v713, %v838
        %v840 = vpop.f32.mrb[0].mxu0
        %841 = vmatprep.mubr.f32.mxu0 0.0
        %842 = vmatmul.mubr.f32.gmra.mrb[0].mxu0 %v737
        %v843 = vpop.f32.mrb[0].mxu0
        %v844 = vadd.f32 %v713, %v843
        %v845 = vpop.f32.mrb[0].mxu0
        %846 = vdwg.mxu0
        %v847 = vmax.f32 %v809, 0.0
        %v848 = vmax.f32 %v814, 0.0
        %v849 = vmax.f32 %v819, 0.0
        %v850 = vmax.f32 %v824, 0.0
        %v851 = vmax.f32 %v829, 0.0
        %v852 = vmax.f32 %v834, 0.0
        %v853 = vmax.f32 %v839, 0.0
        %v854 = vmax.f32 %v844, 0.0
        %v855 = vld [vmem:[%s7] sm:$0x3f]
        %v856 = vld [vmem:[#allocation2] sm:$0x1]
        %v858 = vlaneseq
        %v859 = vshrl.u32 %v858, 7
        %v860 = vsub.s32 0, %v859
        %v861 = vrot.slane %v856, %v860
        %v864 = vsel %vm550, %v847, 0
        %v867 = vsel %vm550, %v848, 0
        %v870 = vsel %vm550, %v849, 0
        %v873 = vsel %vm550, %v850, 0
        %v876 = vsel %vm550, %v851, 0
        %v879 = vsel %vm550, %v852, 0
        %v882 = vsel %vm550, %v853, 0
        %v885 = vsel %vm550, %v854, 0
        %v888 = vsel %vm575, %v855, 0
        %890 = vmatprep.subr.mxu0 0.0
        %891 = vmatpush1.msra.mxu0 %v888
        %892 = vmatprep.subr.mxu0 0.0
        %893 = vmatpush1.msra.mxu0 0.0
        %894 = vmatprep.subr.mxu0 0.0
        %895 = vmatpush1.msra.mxu0 0.0
        %896 = vmatprep.subr.mxu0 0.0
        %897 = vmatpush1.msra.mxu0 0.0
        %898 = vmatprep.subr.mxu0 0.0
        %899 = vmatpush1.msra.mxu0 0.0
        %900 = vmatprep.subr.mxu0 0.0
        %901 = vmatpush1.msra.mxu0 0.0
        %902 = vmatprep.subr.mxu0 0.0
        %903 = vmatpush1.msra.mxu0 0.0
        %904 = vmatprep.subr.mxu0 0.0
        %905 = vmatpush1.msra.mxu0 0.0
        %906 = vmatprep.subr.mxu0 0.0
        %907 = vmatpush1.msra.mxu0 0.0
        %908 = vmatprep.subr.mxu0 0.0
        %909 = vmatpush1.msra.mxu0 0.0
        %910 = vmatprep.subr.mxu0 0.0
        %911 = vmatpush1.msra.mxu0 0.0
        %912 = vmatprep.subr.mxu0 0.0
        %913 = vmatpush1.msra.mxu0 0.0
        %914 = vmatprep.subr.mxu0 0.0
        %915 = vmatpush1.msra.mxu0 0.0
        %916 = vmatprep.subr.mxu0 0.0
        %917 = vmatpush1.msra.mxu0 0.0
        %918 = vmatprep.subr.mxu0 0.0
        %919 = vmatpush1.msra.mxu0 0.0
        %920 = vmatprep.subr.mxu0 0.0
        %921 = vmatpush1.msra.mxu0 0.0
        %922 = vmatprep.subr.mxu0 0.0
        %923 = vmatpush1.msra.mxu0 0.0
        %924 = vmatprep.subr.mxu0 0.0
        %925 = vmatpush1.msra.mxu0 0.0
        %926 = vmatprep.subr.mxu0 0.0
        %927 = vmatpush1.msra.mxu0 0.0
        %928 = vmatprep.subr.mxu0 0.0
        %929 = vmatpush1.msra.mxu0 0.0
        %930 = vmatprep.subr.mxu0 0.0
        %931 = vmatpush1.msra.mxu0 0.0
        %932 = vmatprep.subr.mxu0 0.0
        %933 = vmatpush1.msra.mxu0 0.0
        %934 = vmatprep.subr.mxu0 0.0
        %935 = vmatpush1.msra.mxu0 0.0
        %936 = vmatprep.subr.mxu0 0.0
        %937 = vmatpush1.msra.mxu0 0.0
        %938 = vmatprep.subr.mxu0 0.0
        %939 = vmatpush1.msra.mxu0 0.0
        %940 = vmatprep.subr.mxu0 0.0
        %941 = vmatpush1.msra.mxu0 0.0
        %942 = vmatprep.subr.mxu0 0.0
        %943 = vmatpush1.msra.mxu0 0.0
        %944 = vmatprep.subr.mxu0 0.0
        %945 = vmatpush1.msra.mxu0 0.0
        %946 = vmatprep.subr.mxu0 0.0
        %947 = vmatpush1.msra.mxu0 0.0
        %948 = vmatprep.subr.mxu0 0.0
        %949 = vmatpush1.msra.mxu0 0.0
        %950 = vmatprep.subr.mxu0 0.0
        %951 = vmatpush1.msra.mxu0 0.0
        %952 = vmatprep.subr.mxu0 0.0
        %953 = vmatpush1.msra.mxu0 0.0
        %954 = vmatprep.mubr.f32.mxu0 0.0
        %955 = vmatmul.mubr.f32.gmra.mrb[0].mxu0 %v864
        %v956 = vpop.f32.mrb[0].mxu0
        %v957 = vadd.f32 %v861, %v956
        %v958 = vpop.f32.mrb[0].mxu0
        %959 = vmatprep.mubr.f32.mxu0 0.0
        %960 = vmatmul.mubr.f32.gmra.mrb[0].mxu0 %v867
        %v961 = vpop.f32.mrb[0].mxu0
        %v962 = vadd.f32 %v861, %v961
        %v963 = vpop.f32.mrb[0].mxu0
        %964 = vmatprep.mubr.f32.mxu0 0.0
        %965 = vmatmul.mubr.f32.gmra.mrb[0].mxu0 %v870
        %v966 = vpop.f32.mrb[0].mxu0
        %v967 = vadd.f32 %v861, %v966
        %v968 = vpop.f32.mrb[0].mxu0
        %969 = vmatprep.mubr.f32.mxu0 0.0
        %970 = vmatmul.mubr.f32.gmra.mrb[0].mxu0 %v873
        %v971 = vpop.f32.mrb[0].mxu0
        %v972 = vadd.f32 %v861, %v971
        %v973 = vpop.f32.mrb[0].mxu0
        %974 = vmatprep.mubr.f32.mxu0 0.0
        %975 = vmatmul.mubr.f32.gmra.mrb[0].mxu0 %v876
        %v976 = vpop.f32.mrb[0].mxu0
        %v977 = vadd.f32 %v861, %v976
        %v978 = vpop.f32.mrb[0].mxu0
        %979 = vmatprep.mubr.f32.mxu0 0.0
        %980 = vmatmul.mubr.f32.gmra.mrb[0].mxu0 %v879
        %v981 = vpop.f32.mrb[0].mxu0
        %v982 = vadd.f32 %v861, %v981
        %v983 = vpop.f32.mrb[0].mxu0
        %984 = vmatprep.mubr.f32.mxu0 0.0
        %985 = vmatmul.mubr.f32.gmra.mrb[0].mxu0 %v882
        %v986 = vpop.f32.mrb[0].mxu0
        %v987 = vadd.f32 %v861, %v986
        %v988 = vpop.f32.mrb[0].mxu0
        %989 = vmatprep.mubr.f32.mxu0 0.0
        %990 = vmatmul.mubr.f32.gmra.mrb[0].mxu0 %v885
        %v991 = vpop.f32.mrb[0].mxu0
        %v992 = vadd.f32 %v861, %v991
        %v993 = vpop.f32.mrb[0].mxu0
        %994 = vdwg.mxu0
        %vm995 = vcmask 7168
        %996 = vst.msk [vmem:[%s364] sm:$0xff] %vm995, %v957
        %997 = vst.msk [vmem:[%s364 + $0x8] sm:$0xff] %vm995, %v962
        %998 = vst.msk [vmem:[%s364 + $0x10] sm:$0xff] %vm995, %v967
        %999 = vst.msk [vmem:[%s364 + $0x18] sm:$0xff] %vm995, %v972
        %1000 = vst.msk [vmem:[%s364 + $0x20] sm:$0xff] %vm995, %v977
        %1001 = vst.msk [vmem:[%s364 + $0x28] sm:$0xff] %vm995, %v982
        %1002 = vst.msk [vmem:[%s364 + $0x30] sm:$0xff] %vm995, %v987
        %1003 = vst.msk [vmem:[%s364 + $0x38] sm:$0xff] %vm995, %v992
        %s1004 = sand.u32 %s229, 1
        %s1005 = sand.u32 %s229, 1
        %s1006 = smul.addr %s1005, 64
        %s1007 = scalar_lea.vmem [#allocation3], %s1006
        // Predicated region
        $region57: #{tpu_custom_call.1} parent=55 // pred_check
          %p1008 = pneg %p239
        $region58: #{tpu_custom_call.1} parent=55 // pred_check_branch
          %1010 = sbr.rel (%p1008) target = $region60
        $region59: #{tpu_custom_call.1} parent=55 // pred_region
          %s1011 = smul.u32 8, %s22
          %s1012 = ssub.s32 25, %s1011
          %p1013 = scmp.lt.s32.totalorder %s1012, 8
          %s1014 = scalar_select %p1013, %s1012, 8
          %s1015 = smul.u32 128, %s1014
          %p1016 = scmp.ne.s32.totalorder 0, %s1015
          %s1017 = smul.addr %s1011, 8
          %s1018 = scalar_lea.vmem %s9, %s1017
          // Predicated region
          $region61: #{tpu_custom_call.1} parent=59 // pred_check
            %p1019 = pneg %p1016
          $region62: #{tpu_custom_call.1} parent=59 // pred_check_branch
            %1021 = sbr.rel (%p1019) target = $region64
          $region63: #{tpu_custom_call.1} parent=59 // pred_region
            // Predicated region
            $region65: #{tpu_custom_call.1} parent=63 // pred_check
              _
            $region66: #{tpu_custom_call.1} parent=63 // pred_check_branch
              %1023 = sbr.rel (0) target = $region68
            $region67: #{tpu_custom_call.1} parent=63 // pred_region
              // Predicated region
              $region87: #{tpu_custom_call.1} parent=67 // pred_check
                _
              $region88: #{tpu_custom_call.1} parent=67 // pred_check_branch
                %1086 = sbr.rel (0) target = $region90
              $region89: #{tpu_custom_call.1} parent=67 // pred_region
                %s1087 = sshrl.u32 %s1014, 3
                // While loop
                $region91: #{tpu_custom_call.1} parent=89 // loop_pre_header
                  _
                $region92: #{tpu_custom_call.1} parent=89 // loop_header
                  %s1089 = sphi 0, %s1091
                  %p1090 = scmp.ge.s32.totalorder %s1089, %s1087
                  %s1094 = sphi 0, %s1115
                  %s1095 = sphi %s1007, %s1118
                  %s1096 = sphi %s1018, %s1119
                $region93: #{tpu_custom_call.1} parent=89 // loop_header_branch
                  %1093 = sbr.rel (%p1090) target = $region97
                $region94: #{tpu_custom_call.1} parent=89 // loop_body
                  %v1097 = vld [vmem:[%s1095] sm:$0xff]
                  %1098 = vst [vmem:[%s1096] sm:$0xff] %v1097
                  %v1099 = vld [vmem:[%s1095 + $0x8] sm:$0xff]
                  %1100 = vst [vmem:[%s1096 + $0x8] sm:$0xff] %v1099
                  %v1101 = vld [vmem:[%s1095 + $0x10] sm:$0xff]
                  %1102 = vst [vmem:[%s1096 + $0x10] sm:$0xff] %v1101
                  %v1103 = vld [vmem:[%s1095 + $0x18] sm:$0xff]
                  %1104 = vst [vmem:[%s1096 + $0x18] sm:$0xff] %v1103
                  %v1105 = vld [vmem:[%s1095 + $0x20] sm:$0xff]
                  %1106 = vst [vmem:[%s1096 + $0x20] sm:$0xff] %v1105
                  %v1107 = vld [vmem:[%s1095 + $0x28] sm:$0xff]
                  %1108 = vst [vmem:[%s1096 + $0x28] sm:$0xff] %v1107
                  %v1109 = vld [vmem:[%s1095 + $0x30] sm:$0xff]
                  %1110 = vst [vmem:[%s1096 + $0x30] sm:$0xff] %v1109
                  %v1111 = vld [vmem:[%s1095 + $0x38] sm:$0xff]
                  %1112 = vst [vmem:[%s1096 + $0x38] sm:$0xff] %v1111
                  %s1113 = sadd.s32 1, %s1094
                  %p1114 = scmp.ge.s32.totalorder %s1113, %s1087
                  %s1115 = scalar_select %p1114, 0, %s1113
                  %s1116 = smul.u32 %s1115, 64
                  %s1117 = smul.u32 %s1115, 64
                  %s1118 = scalar_lea.vmem %s1007, %s1116 [#allocation3]
                  %s1119 = scalar_lea.vmem %s1018, %s1117
                $region95: #{tpu_custom_call.1} parent=89 // loop_footer
                  %s1091 = sadd.s32 %s1089, 1
                $region96: #{tpu_custom_call.1} parent=89 // loop_footer_branch
                  %1088 = sbr.rel target = $region92
                $region97: #{tpu_custom_call.1} parent=89 // loop_exit
                  _
                %s1120 = sshrl.u32 %s1014, 3
                %s1121 = sand.u32 %s1014, 7
                %s1122 = smul.u32 %s1120, 8
                %s1123 = smul.u32 8, %s1122
                %s1124 = scalar_lea.vmem %s1007, %s1123 [#allocation3]
                %s1125 = smul.u32 8, %s1122
                %s1126 = scalar_lea.vmem %s1018, %s1125
                // While loop
                $region98: #{tpu_custom_call.1} parent=89 // loop_pre_header
                  _
                $region99: #{tpu_custom_call.1} parent=89 // loop_header
                  %s1128 = sphi 0, %s1130
                  %p1129 = scmp.ge.s32.totalorder %s1128, %s1121
                  %s1133 = sphi 0, %s1140
                  %s1134 = sphi %s1124, %s1143
                  %s1135 = sphi %s1126, %s1144
                $region100: #{tpu_custom_call.1} parent=89 // loop_header_branch
                  %1132 = sbr.rel (%p1129) target = $region104
                $region101: #{tpu_custom_call.1} parent=89 // loop_body
                  %v1136 = vld [vmem:[%s1134] sm:$0xff]
                  %1137 = vst [vmem:[%s1135] sm:$0xff] %v1136
                  %s1138 = sadd.s32 1, %s1133
                  %p1139 = scmp.ge.s32.totalorder %s1138, %s1121
                  %s1140 = scalar_select %p1139, 0, %s1138
                  %s1141 = smul.u32 %s1140, 8
                  %s1142 = smul.u32 %s1140, 8
                  %s1143 = scalar_lea.vmem %s1124, %s1141 [#allocation3]
                  %s1144 = scalar_lea.vmem %s1126, %s1142
                $region102: #{tpu_custom_call.1} parent=89 // loop_footer
                  %s1130 = sadd.s32 %s1128, 1
                $region103: #{tpu_custom_call.1} parent=89 // loop_footer_branch
                  %1127 = sbr.rel target = $region99
                $region104: #{tpu_custom_call.1} parent=89 // loop_exit
                  _
              $region90: #{tpu_custom_call.1} parent=67 // pred_fallthru
                _
              // Predicated region
              $region105: #{tpu_custom_call.1} parent=67 // pred_check
                _
              $region106: #{tpu_custom_call.1} parent=67 // pred_check_branch
                %1146 = sbr.rel target = $region108
              $region107: #{tpu_custom_call.1} parent=67 // pred_region
                _
              $region108: #{tpu_custom_call.1} parent=67 // pred_fallthru
                _
            $region68: #{tpu_custom_call.1} parent=63 // pred_fallthru
              _
            // Predicated region
            $region69: #{tpu_custom_call.1} parent=63 // pred_check
              _
            $region70: #{tpu_custom_call.1} parent=63 // pred_check_branch
              %1025 = sbr.rel target = $region72
            $region71: #{tpu_custom_call.1} parent=63 // pred_region
              %s1027 = sshrl.u32 %s1014, 3
              // While loop
              $region73: #{tpu_custom_call.1} parent=71 // loop_pre_header
                _
              $region74: #{tpu_custom_call.1} parent=71 // loop_header
                %s1029 = sphi 0, %s1031
                %p1030 = scmp.ge.s32.totalorder %s1029, %s1027
                %s1034 = sphi 0, %s1055
                %s1035 = sphi %s1007, %s1058
                %s1036 = sphi %s1018, %s1059
              $region75: #{tpu_custom_call.1} parent=71 // loop_header_branch
                %1033 = sbr.rel (%p1030) target = $region79
              $region76: #{tpu_custom_call.1} parent=71 // loop_body
                %v1037 = vld [vmem:[%s1035] sm:$0xff]
                %1038 = vst [vmem:[%s1036] sm:$0xff] %v1037
                %v1039 = vld [vmem:[%s1035 + $0x8] sm:$0xff]
                %1040 = vst [vmem:[%s1036 + $0x8] sm:$0xff] %v1039
                %v1041 = vld [vmem:[%s1035 + $0x10] sm:$0xff]
                %1042 = vst [vmem:[%s1036 + $0x10] sm:$0xff] %v1041
                %v1043 = vld [vmem:[%s1035 + $0x18] sm:$0xff]
                %1044 = vst [vmem:[%s1036 + $0x18] sm:$0xff] %v1043
                %v1045 = vld [vmem:[%s1035 + $0x20] sm:$0xff]
                %1046 = vst [vmem:[%s1036 + $0x20] sm:$0xff] %v1045
                %v1047 = vld [vmem:[%s1035 + $0x28] sm:$0xff]
                %1048 = vst [vmem:[%s1036 + $0x28] sm:$0xff] %v1047
                %v1049 = vld [vmem:[%s1035 + $0x30] sm:$0xff]
                %1050 = vst [vmem:[%s1036 + $0x30] sm:$0xff] %v1049
                %v1051 = vld [vmem:[%s1035 + $0x38] sm:$0xff]
                %1052 = vst [vmem:[%s1036 + $0x38] sm:$0xff] %v1051
                %s1053 = sadd.s32 1, %s1034
                %p1054 = scmp.ge.s32.totalorder %s1053, %s1027
                %s1055 = scalar_select %p1054, 0, %s1053
                %s1056 = smul.u32 %s1055, 64
                %s1057 = smul.u32 %s1055, 64
                %s1058 = scalar_lea.vmem %s1007, %s1056 [#allocation3]
                %s1059 = scalar_lea.vmem %s1018, %s1057
              $region77: #{tpu_custom_call.1} parent=71 // loop_footer
                %s1031 = sadd.s32 %s1029, 1
              $region78: #{tpu_custom_call.1} parent=71 // loop_footer_branch
                %1028 = sbr.rel target = $region74
              $region79: #{tpu_custom_call.1} parent=71 // loop_exit
                _
              %s1060 = sshrl.u32 %s1014, 3
              %s1061 = sand.u32 %s1014, 7
              %s1062 = smul.u32 %s1060, 8
              %s1063 = smul.u32 8, %s1062
              %s1064 = scalar_lea.vmem %s1007, %s1063 [#allocation3]
              %s1065 = smul.u32 8, %s1062
              %s1066 = scalar_lea.vmem %s1018, %s1065
              // While loop
              $region80: #{tpu_custom_call.1} parent=71 // loop_pre_header
                _
              $region81: #{tpu_custom_call.1} parent=71 // loop_header
                %s1068 = sphi 0, %s1070
                %p1069 = scmp.ge.s32.totalorder %s1068, %s1061
                %s1073 = sphi 0, %s1080
                %s1074 = sphi %s1064, %s1083
                %s1075 = sphi %s1066, %s1084
              $region82: #{tpu_custom_call.1} parent=71 // loop_header_branch
                %1072 = sbr.rel (%p1069) target = $region86
              $region83: #{tpu_custom_call.1} parent=71 // loop_body
                %v1076 = vld [vmem:[%s1074] sm:$0xff]
                %1077 = vst [vmem:[%s1075] sm:$0xff] %v1076
                %s1078 = sadd.s32 1, %s1073
                %p1079 = scmp.ge.s32.totalorder %s1078, %s1061
                %s1080 = scalar_select %p1079, 0, %s1078
                %s1081 = smul.u32 %s1080, 8
                %s1082 = smul.u32 %s1080, 8
                %s1083 = scalar_lea.vmem %s1064, %s1081 [#allocation3]
                %s1084 = scalar_lea.vmem %s1066, %s1082
              $region84: #{tpu_custom_call.1} parent=71 // loop_footer
                %s1070 = sadd.s32 %s1068, 1
              $region85: #{tpu_custom_call.1} parent=71 // loop_footer_branch
                %1067 = sbr.rel target = $region81
              $region86: #{tpu_custom_call.1} parent=71 // loop_exit
                _
            $region72: #{tpu_custom_call.1} parent=63 // pred_fallthru
              _
          $region64: #{tpu_custom_call.1} parent=59 // pred_fallthru
            _
          %1147 = vnop
        $region60: #{tpu_custom_call.1} parent=55 // pred_fallthru
          _
      $region56: #{tpu_custom_call.1} parent=5 // pred_fallthru
        _
      %p1148 = scmp.le.s32.totalorder 2, %s17
      // Predicated region
      $region109: #{tpu_custom_call.1} parent=5 // pred_check
        %p1149 = pneg %p1148
      $region110: #{tpu_custom_call.1} parent=5 // pred_check_branch
        %1151 = sbr.rel (%p1149) target = $region112
      $region111: #{tpu_custom_call.1} parent=5 // pred_region
        %s1152 = ssub.s32 %s17, 2
        // Predicated region
        $region113: #{tpu_custom_call.1} parent=111 // pred_check
          %p1153 = pneg %p245
        $region114: #{tpu_custom_call.1} parent=111 // pred_check_branch
          %1155 = sbr.rel (%p1153) target = $region116
        $region115: #{tpu_custom_call.1} parent=111 // pred_region
          %s1156 = sand.u32 %s230, 1
          %s1157 = sand.u32 %s230, 1
          %s1158 = smul.addr %s1157, 64
          %s1159 = scalar_lea.vmem [#allocation3], %s1158
        $region116: #{tpu_custom_call.1} parent=111 // pred_fallthru
          _
      $region112: #{tpu_custom_call.1} parent=5 // pred_fallthru
        _
    $region6: #{tpu_custom_call.1} parent=1 // loop_footer
      %s21 = sadd.s32 1, %s17
    $region7: #{tpu_custom_call.1} parent=1 // loop_footer_branch
      %16 = sbr.rel target = $region3
    $region8: #{tpu_custom_call.1} parent=1 // loop_exit
      _

</llo_original>
